<compile_context>
chip_gen: v6e
topology: v6e:2x2x1
jax: 0.10.0
libtpu: 0.0.40
codegen_flags: <defaults>
</compile_context>

<pallas_src>
import functools

import jax
import jax.numpy as jnp
import numpy as np
from jax.experimental import pallas as pl
from jax.experimental.pallas import tpu as pltpu


_MIN_GRID_STEPS = 8          # keep the DMA/compute pipeline full
_VMEM_CONFIG = None          # (tile_budget_bytes, vmem_limit_bytes), cached


def _get_vmem_config():
    """Per-generation tile budget + scoped-VMEM limit (cached)."""
    global _VMEM_CONFIG
    if _VMEM_CONFIG is None:
        cap = None
        try:
            cap = int(pltpu.get_tpu_info().vmem_capacity_bytes)
        except Exception:
            cap = None
        if cap is not None and cap >= 100 * 1024 * 1024:
            # v5e / v6e: 128 MiB physical VMEM -> fat tiles, raised scoped limit.
            _VMEM_CONFIG = (20 * 1024 * 1024, 80 * 1024 * 1024)
        elif cap is not None:
            # v7x: 64 MiB per TensorCore -> keep well under ~48 MiB scoped.
            _VMEM_CONFIG = (8 * 1024 * 1024, 40 * 1024 * 1024)
        else:
            # Unknown backend: conservative defaults.
            _VMEM_CONFIG = (8 * 1024 * 1024, 32 * 1024 * 1024)
    return _VMEM_CONFIG


def _sublane_gran(dtype):
    """Minimum clean sublane tile multiple for a dtype."""
    it = jnp.dtype(dtype).itemsize
    if it >= 4:
        return 8
    if it == 2:
        return 16
    return 32


def _pick_row_tile(b, m, w, in_item, out_item, gran, budget):
    """Row tile over the merged (Cout*H) axis.

    Largest divisor of m that is a multiple of `gran`, fits the VMEM budget
    (double-buffered in/out blocks + ~20 f32 temporaries per row), and still
    leaves >= _MIN_GRID_STEPS grid steps for software pipelining / megacore.
    """
    # Real per-merged-row working set:
    #   input block  : 4 groups * w * in_item, double-buffered
    #   output block : 4w * out_item,          double-buffered
    #   f32 temps    : x1..x4, s/d, ee/eo/oe/oo, top/bot, concat  ~= 20 floats/col
    bytes_per_row = 8 * w * (in_item + out_item) + 80 * w
    cap_budget = max(gran, budget // max(bytes_per_row, 1))

    # Keep enough grid steps: b * (m // tm) >= _MIN_GRID_STEPS when possible.
    need = -(-_MIN_GRID_STEPS // max(b, 1))          # ceil(min_steps / b)
    cap_steps = max(gran, m // max(need, 1))

    cap = max(gran, min(cap_budget, cap_steps))

    # Candidate tiles: divisors of m that are multiples of gran.
    cands = [t for t in range(gran, m + 1, gran) if m % t == 0]
    if not cands:
        return m                                      # full-dim block is always legal
    under = [t for t in cands if t <= cap]
    return max(under) if under else min(cands)        # never blow the budget silently


def _iwt_kernel(x_ref, o_ref):
    # x_ref block: (1, 4, tm, W)  -- 4 channel groups, tm merged (Cout*H) rows
    # o_ref block: (1, tm, 4W)    -- row r = [interleave(ee,eo) | interleave(oe,oo)]
    tm = x_ref.shape[2]
    w = x_ref.shape[3]

    x1 = x_ref[0, 0].astype(jnp.float32)
    x2 = x_ref[0, 1].astype(jnp.float32)
    x3 = x_ref[0, 2].astype(jnp.float32)
    x4 = x_ref[0, 3].astype(jnp.float32)

    # Shared-temp Haar butterfly with the 1/2 scale folded in (f32).
    s14 = (x1 + x4) * 0.5
    d14 = (x1 - x4) * 0.5
    s23 = (x2 + x3) * 0.5
    d23 = (x2 - x3) * 0.5

    # Cast to the output dtype BEFORE the interleave (pure data movement after).
    ee = (s14 - s23).astype(o_ref.dtype)   # h[:, :, 0::2, 0::2]
    eo = (d14 + d23).astype(o_ref.dtype)   # h[:, :, 0::2, 1::2]
    oe = (d14 - d23).astype(o_ref.dtype)   # h[:, :, 1::2, 0::2]
    oo = (s14 + s23).astype(o_ref.dtype)   # h[:, :, 1::2, 1::2]

    # Lane (column) interleave only; no sublane interleave needed because the
    # output is viewed as (B, Cout*H, 4W): even output row followed by odd
    # output row, side by side in the lane dimension.
    top = jnp.stack([ee, eo], axis=-1).reshape(tm, 2 * w)   # output rows 2r
    bot = jnp.stack([oe, oo], axis=-1).reshape(tm, 2 * w)   # output rows 2r+1
    o_ref[0] = jnp.concatenate([top, bot], axis=-1)          # (tm, 4W)


@functools.partial(jax.jit, static_argnames=("budget", "vmem_limit"))
def _iwt_impl(x, *, budget, vmem_limit):
    b, c, h, w = x.shape
    cout = c // 4
    m = cout * h

    in_item = jnp.dtype(x.dtype).itemsize
    out_dtype = jnp.float32                 # mirror torch .float() in iwt_init
    out_item = 4
    gran = max(_sublane_gran(x.dtype), _sublane_gran(out_dtype))
    tm = _pick_row_tile(b, m, w, in_item, out_item, gran, budget)

    # Free reshape: channel groups are contiguous; (Cout, H) merge to M rows.
    xr = x.reshape(b, 4, m, w)

    cost = pl.CostEstimate(
        flops=12 * b * m * w,
        transcendentals=0,
        bytes_accessed=4 * b * m * w * (in_item + out_item),
    )

    out = pl.pallas_call(
        _iwt_kernel,
        out_shape=jax.ShapeDtypeStruct((b, m, 4 * w), out_dtype),
        grid_spec=pltpu.PrefetchScalarGridSpec(
            num_scalar_prefetch=0,
            grid=(b, m // tm),
            in_specs=[pl.BlockSpec((1, 4, tm, w), lambda bi, i: (bi, 0, i, 0))],
            out_specs=pl.BlockSpec((1, tm, 4 * w), lambda bi, i: (bi, i, 0)),
        ),
        compiler_params=pltpu.CompilerParams(
            dimension_semantics=("parallel", "parallel"),
            vmem_limit_bytes=vmem_limit,
        ),
        cost_estimate=cost,
    )(xr)

    # Free reshape: flat index (cH + r)*4W + p*2W + col == flat index of
    # (Cout, 2H, 2W) at [c, 2r+p, col]  ->  pure dimension split/merge.
    return out.reshape(b, cout, 2 * h, 2 * w)


def iwt(x):
    """Pallas implementation of iwt_init / IWT.forward (NCHW).  Output is f32."""
    if x.ndim != 4:
        raise ValueError(f"expected NCHW input, got shape {x.shape}")
    if x.shape[1] % 4 != 0:
        raise ValueError("input channel count must be divisible by 4")
    budget, vmem_limit = _get_vmem_config()
    return _iwt_impl(x, budget=budget, vmem_limit=vmem_limit)


# ---------------------------------------------------------------------------
# Pure-JAX reference (mirrors the PyTorch iwt_init) and self-test.
# ---------------------------------------------------------------------------

def _iwt_reference(x):
    b, c, h, w = x.shape
    cout = c // 4
    x1 = x[:, 0 * cout:1 * cout].astype(jnp.float32) / 2
    x2 = x[:, 1 * cout:2 * cout].astype(jnp.float32) / 2
    x3 = x[:, 2 * cout:3 * cout].astype(jnp.float32) / 2
    x4 = x[:, 3 * cout:4 * cout].astype(jnp.float32) / 2
    out = jnp.zeros((b, cout, 2 * h, 2 * w), jnp.float32)
    out = out.at[:, :, 0::2, 0::2].set(x1 - x2 - x3 + x4)
    out = out.at[:, :, 1::2, 0::2].set(x1 - x2 + x3 - x4)
    out = out.at[:, :, 0::2, 1::2].set(x1 + x2 - x3 - x4)
    out = out.at[:, :, 1::2, 1::2].set(x1 + x2 + x3 + x4)
    return out


if __name__ == "__main__":
    # f32 input: B=2, C=4 (Cout=1), H=W=16 -> output (2, 1, 32, 32), f32.
    x = jax.random.normal(jax.random.PRNGKey(0), (2, 4, 16, 16), dtype=jnp.float32)
    out = jax.block_until_ready(iwt(x))
    ref = _iwt_reference(x)
    assert out.shape == (2, 1, 32, 32)
    assert out.dtype == jnp.float32
    np.testing.assert_allclose(np.asarray(out), np.asarray(ref), rtol=1e-6, atol=1e-6)

    # bf16 input exercises the dtype-aware (16-row) sublane granularity;
    # output stays f32 like torch .float().
    xb = jax.random.normal(jax.random.PRNGKey(1), (1, 8, 16, 16), dtype=jnp.bfloat16)
    outb = jax.block_until_ready(iwt(xb))
    refb = _iwt_reference(xb)
    assert outb.shape == (1, 2, 32, 32)
    assert outb.dtype == jnp.float32
    np.testing.assert_allclose(np.asarray(outb), np.asarray(refb), rtol=1e-6, atol=1e-6)

    print("KERNEL_OK")
</pallas_src>

<mosaic_0001>
module attributes {stable_mosaic.version = 11 : i64} {
  func.func @_iwt_kernel(%arg0: i32, %arg1: i32, %arg2: memref<1x4x8x16xf32, #tpu.memory_space<vmem>>, %arg3: memref<1x8x64xf32, #tpu.memory_space<vmem>>) attributes {dimension_semantics = [#tpu.dimension_semantics<parallel>, #tpu.dimension_semantics<parallel>], iteration_bounds = array<i64: 2, 2>, scalar_prefetch = 0 : i64, scratch_operands = 0 : i64, tpu.core_type = #tpu.core_type<tc>, window_params = [{transform_indices = @transform_0, window_bounds = array<i64: 1, 4, 8, 16>}, {transform_indices = @transform_1, window_bounds = array<i64: 1, 8, 64>}]} {
    %c0 = arith.constant 0 : index
    %c0_0 = arith.constant 0 : index
    %c0_1 = arith.constant 0 : index
    %c0_2 = arith.constant 0 : index
    %0 = vector.load %arg2[%c0, %c0_0, %c0_1, %c0_2] : memref<1x4x8x16xf32, #tpu.memory_space<vmem>>, vector<1x1x8x16xf32>
    %1 = vector.shape_cast %0 : vector<1x1x8x16xf32> to vector<8x16xf32>
    %c0_3 = arith.constant 0 : index
    %c1 = arith.constant 1 : index
    %c0_4 = arith.constant 0 : index
    %c0_5 = arith.constant 0 : index
    %2 = vector.load %arg2[%c0_3, %c1, %c0_4, %c0_5] : memref<1x4x8x16xf32, #tpu.memory_space<vmem>>, vector<1x1x8x16xf32>
    %3 = vector.shape_cast %2 : vector<1x1x8x16xf32> to vector<8x16xf32>
    %c0_6 = arith.constant 0 : index
    %c2 = arith.constant 2 : index
    %c0_7 = arith.constant 0 : index
    %c0_8 = arith.constant 0 : index
    %4 = vector.load %arg2[%c0_6, %c2, %c0_7, %c0_8] : memref<1x4x8x16xf32, #tpu.memory_space<vmem>>, vector<1x1x8x16xf32>
    %5 = vector.shape_cast %4 : vector<1x1x8x16xf32> to vector<8x16xf32>
    %c0_9 = arith.constant 0 : index
    %c3 = arith.constant 3 : index
    %c0_10 = arith.constant 0 : index
    %c0_11 = arith.constant 0 : index
    %6 = vector.load %arg2[%c0_9, %c3, %c0_10, %c0_11] : memref<1x4x8x16xf32, #tpu.memory_space<vmem>>, vector<1x1x8x16xf32>
    %7 = vector.shape_cast %6 : vector<1x1x8x16xf32> to vector<8x16xf32>
    %8 = arith.addf %1, %7 : vector<8x16xf32>
    %cst = arith.constant 5.000000e-01 : f32
    %9 = vector.broadcast %cst : f32 to vector<8x16xf32>
    %10 = arith.mulf %8, %9 : vector<8x16xf32>
    %11 = arith.subf %1, %7 : vector<8x16xf32>
    %cst_12 = arith.constant 5.000000e-01 : f32
    %12 = vector.broadcast %cst_12 : f32 to vector<8x16xf32>
    %13 = arith.mulf %11, %12 : vector<8x16xf32>
    %14 = arith.addf %3, %5 : vector<8x16xf32>
    %cst_13 = arith.constant 5.000000e-01 : f32
    %15 = vector.broadcast %cst_13 : f32 to vector<8x16xf32>
    %16 = arith.mulf %14, %15 : vector<8x16xf32>
    %17 = arith.subf %3, %5 : vector<8x16xf32>
    %cst_14 = arith.constant 5.000000e-01 : f32
    %18 = vector.broadcast %cst_14 : f32 to vector<8x16xf32>
    %19 = arith.mulf %17, %18 : vector<8x16xf32>
    %20 = arith.subf %10, %16 : vector<8x16xf32>
    %21 = arith.addf %13, %19 : vector<8x16xf32>
    %22 = arith.subf %13, %19 : vector<8x16xf32>
    %23 = arith.addf %10, %16 : vector<8x16xf32>
    %24 = vector.shape_cast %20 : vector<8x16xf32> to vector<8x16x1xf32>
    %25 = vector.shape_cast %21 : vector<8x16xf32> to vector<8x16x1xf32>
    %26 = tpu.concatenate %24, %25 in 2 : vector<8x16x1xf32>, vector<8x16x1xf32> -> vector<8x16x2xf32>
    %27 = vector.shape_cast %26 : vector<8x16x2xf32> to vector<8x32xf32>
    %28 = vector.shape_cast %22 : vector<8x16xf32> to vector<8x16x1xf32>
    %29 = vector.shape_cast %23 : vector<8x16xf32> to vector<8x16x1xf32>
    %30 = tpu.concatenate %28, %29 in 2 : vector<8x16x1xf32>, vector<8x16x1xf32> -> vector<8x16x2xf32>
    %31 = vector.shape_cast %30 : vector<8x16x2xf32> to vector<8x32xf32>
    %32 = tpu.concatenate %27, %31 in 1 : vector<8x32xf32>, vector<8x32xf32> -> vector<8x64xf32>
    %c0_15 = arith.constant 0 : index
    %c0_16 = arith.constant 0 : index
    %c0_17 = arith.constant 0 : index
    %33 = vector.load %arg3[%c0_15, %c0_16, %c0_17] : memref<1x8x64xf32, #tpu.memory_space<vmem>>, vector<1x8x64xf32>
    %34 = vector.shape_cast %33 : vector<1x8x64xf32> to vector<8x64xf32>
    %35 = vector.shape_cast %32 : vector<8x64xf32> to vector<1x8x64xf32>
    tpu.vector_store %arg3[%c0_15, %c0_16, %c0_17], %35 {strides = array<i32>} : memref<1x8x64xf32, #tpu.memory_space<vmem>>, vector<1x8x64xf32>,
    return
  }
  func.func @transform_0(%arg0: i32, %arg1: i32) -> (i32, i32, i32, i32) {
    %c0_i32 = arith.constant 0 : i32
    %c0_i32_0 = arith.constant 0 : i32
    %c0_i32_1 = arith.constant 0 : i32
    return %arg0, %c0_i32, %arg1, %c0_i32_0 : i32, i32, i32, i32
  }
  func.func @transform_1(%arg0: i32, %arg1: i32) -> (i32, i32, i32) {
    %c0_i32 = arith.constant 0 : i32
    %c0_i32_0 = arith.constant 0 : i32
    return %arg0, %arg1, %c0_i32 : i32, i32, i32
  }
}

</mosaic_0001>

<llo_original>
// kernel: _iwt_impl.1
$region0: #{_iwt_impl.1}
  #allocation0 [shape = 'u32[]', space=smem, size = 0x4, offset = 0x4, fixed_abs, tag = 'smem constant byte address 0x4 - core index']
  #allocation1 [shape = 'u32[144,128]{1,0:T(1,128)}', space=vmem, size = 0x12000, scoped, tag = 'internal scratch']
  %s0 = inlined_call_operand.hbm [shape: f32[2,4,16,16], index: 0, kind: input, shape index: {}]
  %s1 = inlined_call_operand.vmem [shape: f32[2,16,64], index: 1, kind: output, shape index: {}]
  %s2 = sld [smem:[#allocation0]]
  $region41: #{_iwt_impl.1} parent=0
    _
  %s4 = ssub.s32 1, %s2
  %s5 = scalar_select 0, %s4, %s2
  $region1: #{_iwt_impl.1} parent=0
    #allocation2 [shape = 'u8[32768]{0}', space=vmem, size = 0x8000, scoped, tag = 'input window, operand 0']
    #allocation3 [shape = 's32[2]{0}', space=sflag, size = 0x8, scoped, tag = 'scoped memory for _iwt_impl.1']
    %6 = vsyncpa [#allocation3], 0
    %s7 = scalar_lea.sflag [#allocation3], 1
    %8 = vsyncpa %s7, 0
    loop: start=0, step=1, limit=6
    $region2: #{_iwt_impl.1} parent=1 // loop_pre_header
      _
    $region3: #{_iwt_impl.1} parent=1 // loop_header
      %s10 = sphi 0, %s14
      %p11 = scmp.ge.s32.totalorder %s10, 6
      %s17 = sphi 0, %s29
      %s18 = sphi 0, %s25
      %s19 = sphi 0, %s17
      %s20 = sphi 0, %s18
      %s21 = sphi 0, %s19
      %s22 = sphi 0, %s20
      %s34 = sphi 0, %s36
      %s37 = sphi 0, %s34
      %s38 = sphi 0, %s37
      %s54 = sphi 0, %s38
      %s62 = sphi 0, %s64
      %s65 = sphi 0, %s62
      %s66 = sphi 0, %s65
      %s82 = sphi 0, %s66
    $region4: #{_iwt_impl.1} parent=1 // loop_header_branch
      %13 = sbr.rel (%p11) target = $region8
    $region5: #{_iwt_impl.1} parent=1 // loop_body
      %s15 = ssub.s32 %s10, 1
      %s16 = ssub.s32 %s10, 2
      %s23 = sadd.s32 1, %s18
      %p24 = scmp.ge.s32.totalorder %s23, 2
      %s25 = scalar_select %p24, 0, %s23
      %s26 = sadd.s32 1, %s17
      %s27 = scalar_select %p24, %s26, %s17
      %p28 = scmp.ge.s32.totalorder %s27, 2
      %s29 = scalar_select %p28, 0, %s27
      %s30 = ssub.s32 %s17, %s29
      %s31 = ssub.s32 %s18, %s25
      %s32 = sor.u32 %s30, %s31
      %p33 = scmp.eq.s32.totalorder %s32, 0
      %s35 = sadd.s32 %s34, 1
      %s36 = scalar_select %p33, %s34, %s35
      %p39 = pneg %p33
      %p40 = scmp.eq.s32.totalorder %s10, 3
      %p41 = por %p39, %p40
      %p42 = scmp.ne.s32.totalorder %s34, %s37
      %p43 = scmp.eq.s32.totalorder %s10, 0
      %p44 = por %p42, %p43
      %p45 = scmp.ne.s32.totalorder %s34, %s37
      %p46 = scmp.eq.s32.totalorder %s15, 3
      %p47 = por %p45, %p46
      %p48 = scmp.ne.s32.totalorder %s37, %s38
      %p49 = scmp.eq.s32.totalorder %s15, 0
      %p50 = por %p48, %p49
      %p51 = scmp.ne.s32.totalorder %s37, %s38
      %p52 = scmp.eq.s32.totalorder %s16, 3
      %p53 = por %p51, %p52
      %p55 = scmp.ne.s32.totalorder %s38, %s54
      %p56 = scmp.eq.s32.totalorder %s16, 0
      %p57 = por %p55, %p56
      %s58 = ssub.s32 %s17, %s29
      %s59 = ssub.s32 %s18, %s25
      %s60 = sor.u32 %s58, %s59
      %p61 = scmp.eq.s32.totalorder %s60, 0
      %s63 = sadd.s32 %s62, 1
      %s64 = scalar_select %p61, %s62, %s63
      %p67 = pneg %p61
      %p68 = scmp.eq.s32.totalorder %s10, 3
      %p69 = por %p67, %p68
      %p70 = scmp.ne.s32.totalorder %s62, %s65
      %p71 = scmp.eq.s32.totalorder %s10, 0
      %p72 = por %p70, %p71
      %p73 = scmp.ne.s32.totalorder %s62, %s65
      %p74 = scmp.eq.s32.totalorder %s15, 3
      %p75 = por %p73, %p74
      %p76 = scmp.ne.s32.totalorder %s65, %s66
      %p77 = scmp.eq.s32.totalorder %s15, 0
      %p78 = por %p76, %p77
      %p79 = scmp.ne.s32.totalorder %s65, %s66
      %p80 = scmp.eq.s32.totalorder %s16, 3
      %p81 = por %p79, %p80
      %p83 = scmp.ne.s32.totalorder %s66, %s82
      %p84 = scmp.eq.s32.totalorder %s16, 0
      %p85 = por %p83, %p84
      %p86 = scmp.le.s32.totalorder 1, %s10
      %p87 = scmp.lt.s32.totalorder %s10, 5
      %p88 = pnand %p86, %p87
      %p89 = pneg %p88
      // Predicated region
      $region9: #{_iwt_impl.1} parent=5 // pred_check
        _
      $region10: #{_iwt_impl.1} parent=5 // pred_check_branch
        %91 = sbr.rel (%p88) target = $region12
      $region11: #{_iwt_impl.1} parent=5 // pred_region
        %s92 = ssub.s32 %s10, 1
      $region12: #{_iwt_impl.1} parent=5 // pred_fallthru
        _
      %p93 = scmp.lt.s32.totalorder %s10, 4
      // Predicated region
      $region13: #{_iwt_impl.1} parent=5 // pred_check
        %p94 = pneg %p93
      $region14: #{_iwt_impl.1} parent=5 // pred_check_branch
        %96 = sbr.rel (%p94) target = $region16
      $region15: #{_iwt_impl.1} parent=5 // pred_region
        // Predicated region
        $region17: #{_iwt_impl.1} parent=15 // pred_check
          %p97 = pneg %p44
        $region18: #{_iwt_impl.1} parent=15 // pred_check_branch
          %99 = sbr.rel (%p97) target = $region20
        $region19: #{_iwt_impl.1} parent=15 // pred_region
          %s100 = sand.u32 %s34, 1
          %s101 = scalar_lea.sflag [#allocation3], %s100
          %s102 = sand.u32 %s34, 1
          %s103 = smul.addr %s102, 32
          %s104 = scalar_lea.vmem [#allocation2], %s103
          %s106 = ssub.s32 512, 512
          %107 = vsyncadd %s101, %s106
          %s108 = smul.addr %s17, 8
          %s109 = sadd.s32 %s18, %s108
          %s110 = smul.addr %s109, 128
          %s111 = scalar_lea.hbm %s0, %s110
          %s112 = sshll.u32 %s104, 4
          %s113 = int_to_ptr.vmem [resolvable:$true] %s112
          %118 = dma.hbm_to_vmem [thread:$0]  %s111, 512, %s113, %s101, 256, 128, 8
        $region20: #{_iwt_impl.1} parent=15 // pred_fallthru
          _
      $region16: #{_iwt_impl.1} parent=5 // pred_fallthru
        _
      %p119 = scmp.le.s32.totalorder 1, %s10
      %p120 = scmp.lt.s32.totalorder %s10, 5
      %p121 = pnand %p119, %p120
      %p122 = pneg %p121
      // Predicated region
      $region21: #{_iwt_impl.1} parent=5 // pred_check
        _
      $region22: #{_iwt_impl.1} parent=5 // pred_check_branch
        %124 = sbr.rel (%p121) target = $region24
      $region23: #{_iwt_impl.1} parent=5 // pred_region
        %s125 = ssub.s32 %s10, 1
        %s126 = sand.u32 %s37, 1
        %s127 = scalar_lea.sflag [#allocation3], %s126
        %s128 = sand.u32 %s37, 1
        %s129 = smul.addr %s128, 32
        %s130 = scalar_lea.vmem [#allocation2], %s129
        // Predicated region
        $region25: #{_iwt_impl.1} parent=23 // pred_check
          %p131 = pneg %p50
        $region26: #{_iwt_impl.1} parent=23 // pred_check_branch
          %133 = sbr.rel (%p131) target = $region28
        $region27: #{_iwt_impl.1} parent=23 // pred_region
          %134 = dma.done %s127, 512
        $region28: #{_iwt_impl.1} parent=23 // pred_fallthru
          _
        %s135 = sand.u32 %s37, 1
        %s136 = scalar_lea.sflag [#allocation3], %s135
        %s137 = sand.u32 %s37, 1
        %s138 = smul.addr %s137, 32
        %s139 = scalar_lea.vmem [#allocation2], %s138
        %p140 = pneg %p50
        %p141 = pneg %p47
        %p142 = pneg %p78
        %p143 = pneg %p75
        %p144 = scmp.lt.s32.totalorder %s19, 1
        %s145 = scalar_select %p144, %s19, 1
        %p146 = scmp.lt.s32.totalorder %s20, 1
        %s147 = scalar_select %p146, %s20, 1
        %s148 = smul.addr %s145, 2
        %s149 = sadd.s32 %s147, %s148
        %s150 = smul.addr %s149, 8
        %s151 = scalar_lea.vmem %s1, %s150
        %p152 = scmp.lt.s32.totalorder %s19, 1
        %s153 = scalar_select %p152, %s19, 1
        %p154 = scmp.lt.s32.totalorder %s20, 1
        %s155 = scalar_select %p154, %s20, 1
        %s156 = smul.addr %s153, 2
        %s157 = sadd.s32 %s155, %s156
        %s158 = smul.addr %s157, 8
        %s159 = scalar_lea.vmem %s1, %s158
        %v160 = vld [vmem:[%s130] sm:$0xff]
        %s161 = scalar_lea.vmem %s130, 8 [#allocation2]
        %v162 = vld [vmem:[%s161] sm:$0xff]
        %s163 = scalar_lea.vmem %s130, 16 [#allocation2]
        %v164 = vld [vmem:[%s163] sm:$0xff]
        %s165 = scalar_lea.vmem %s130, 24 [#allocation2]
        %v166 = vld [vmem:[%s165] sm:$0xff]
        %v167 = vadd.f32 %v160, %v166
        %v168 = vmul.f32 %v167, 0.5
        %v169 = vsub.f32 %v160, %v166
        %v170 = vmul.f32 %v169, 0.5
        %v171 = vadd.f32 %v162, %v164
        %v172 = vmul.f32 %v171, 0.5
        %v173 = vsub.f32 %v162, %v164
        %v174 = vmul.f32 %v173, 0.5
        %v175 = vsub.f32 %v168, %v172
        %v176 = vadd.f32 %v170, %v174
        %v177 = vsub.f32 %v170, %v174
        %v178 = vadd.f32 %v168, %v172
        %v179 = vlaneseq
        %v180 = vshrl.u32 %v179, 7
        %v181 = vsub.s32 0, %v180
        %v182 = vrot.slane %v175, %v181
        %184 = vbcast.lane.b32.xlu0 %v182, 256
        %v185 = vpop.permute.xlu0 %184
        %s187 = sor.u32 256, 8
        %188 = vbcast.lane.b32.xlu0 %v182, %s187
        %v189 = vpop.permute.xlu0 %188
        %v190 = vlaneseq
        %v191 = vshrl.u32 %v190, 7
        %v192 = vsub.s32 1, %v191
        %v193 = vrot.slane %v175, %v192
        %195 = vbcast.lane.b32.xlu0 %v193, 256
        %v196 = vpop.permute.xlu0 %195
        %s198 = sor.u32 256, 8
        %199 = vbcast.lane.b32.xlu0 %v193, %s198
        %v200 = vpop.permute.xlu0 %199
        %v201 = vlaneseq
        %v202 = vshrl.u32 %v201, 7
        %v203 = vsub.s32 2, %v202
        %v204 = vrot.slane %v175, %v203
        %206 = vbcast.lane.b32.xlu0 %v204, 256
        %v207 = vpop.permute.xlu0 %206
        %s209 = sor.u32 256, 8
        %210 = vbcast.lane.b32.xlu0 %v204, %s209
        %v211 = vpop.permute.xlu0 %210
        %v212 = vlaneseq
        %v213 = vshrl.u32 %v212, 7
        %v214 = vsub.s32 3, %v213
        %v215 = vrot.slane %v175, %v214
        %217 = vbcast.lane.b32.xlu0 %v215, 256
        %v218 = vpop.permute.xlu0 %217
        %s220 = sor.u32 256, 8
        %221 = vbcast.lane.b32.xlu0 %v215, %s220
        %v222 = vpop.permute.xlu0 %221
        %v223 = vlaneseq
        %v224 = vshrl.u32 %v223, 7
        %v225 = vsub.s32 4, %v224
        %v226 = vrot.slane %v175, %v225
        %228 = vbcast.lane.b32.xlu0 %v226, 256
        %v229 = vpop.permute.xlu0 %228
        %s231 = sor.u32 256, 8
        %232 = vbcast.lane.b32.xlu0 %v226, %s231
        %v233 = vpop.permute.xlu0 %232
        %v234 = vlaneseq
        %v235 = vshrl.u32 %v234, 7
        %v236 = vsub.s32 5, %v235
        %v237 = vrot.slane %v175, %v236
        %239 = vbcast.lane.b32.xlu0 %v237, 256
        %v240 = vpop.permute.xlu0 %239
        %s242 = sor.u32 256, 8
        %243 = vbcast.lane.b32.xlu0 %v237, %s242
        %v244 = vpop.permute.xlu0 %243
        %v245 = vlaneseq
        %v246 = vshrl.u32 %v245, 7
        %v247 = vsub.s32 6, %v246
        %v248 = vrot.slane %v175, %v247
        %250 = vbcast.lane.b32.xlu0 %v248, 256
        %v251 = vpop.permute.xlu0 %250
        %s253 = sor.u32 256, 8
        %254 = vbcast.lane.b32.xlu0 %v248, %s253
        %v255 = vpop.permute.xlu0 %254
        %v256 = vlaneseq
        %v257 = vshrl.u32 %v256, 7
        %v258 = vsub.s32 7, %v257
        %v259 = vrot.slane %v175, %v258
        %261 = vbcast.lane.b32.xlu0 %v259, 256
        %v262 = vpop.permute.xlu0 %261
        %s264 = sor.u32 256, 8
        %265 = vbcast.lane.b32.xlu0 %v259, %s264
        %v266 = vpop.permute.xlu0 %265
        %v267 = vlaneseq
        %v268 = vshrl.u32 %v267, 7
        %v269 = vsub.s32 0, %v268
        %v270 = vrot.slane %v176, %v269
        %272 = vbcast.lane.b32.xlu0 %v270, 256
        %v273 = vpop.permute.xlu0 %272
        %s275 = sor.u32 256, 8
        %276 = vbcast.lane.b32.xlu0 %v270, %s275
        %v277 = vpop.permute.xlu0 %276
        %v278 = vlaneseq
        %v279 = vshrl.u32 %v278, 7
        %v280 = vsub.s32 1, %v279
        %v281 = vrot.slane %v176, %v280
        %283 = vbcast.lane.b32.xlu0 %v281, 256
        %v284 = vpop.permute.xlu0 %283
        %s286 = sor.u32 256, 8
        %287 = vbcast.lane.b32.xlu0 %v281, %s286
        %v288 = vpop.permute.xlu0 %287
        %v289 = vlaneseq
        %v290 = vshrl.u32 %v289, 7
        %v291 = vsub.s32 2, %v290
        %v292 = vrot.slane %v176, %v291
        %294 = vbcast.lane.b32.xlu0 %v292, 256
        %v295 = vpop.permute.xlu0 %294
        %s297 = sor.u32 256, 8
        %298 = vbcast.lane.b32.xlu0 %v292, %s297
        %v299 = vpop.permute.xlu0 %298
        %v300 = vlaneseq
        %v301 = vshrl.u32 %v300, 7
        %v302 = vsub.s32 3, %v301
        %v303 = vrot.slane %v176, %v302
        %305 = vbcast.lane.b32.xlu0 %v303, 256
        %v306 = vpop.permute.xlu0 %305
        %s308 = sor.u32 256, 8
        %309 = vbcast.lane.b32.xlu0 %v303, %s308
        %v310 = vpop.permute.xlu0 %309
        %v311 = vlaneseq
        %v312 = vshrl.u32 %v311, 7
        %v313 = vsub.s32 4, %v312
        %v314 = vrot.slane %v176, %v313
        %316 = vbcast.lane.b32.xlu0 %v314, 256
        %v317 = vpop.permute.xlu0 %316
        %s319 = sor.u32 256, 8
        %320 = vbcast.lane.b32.xlu0 %v314, %s319
        %v321 = vpop.permute.xlu0 %320
        %v322 = vlaneseq
        %v323 = vshrl.u32 %v322, 7
        %v324 = vsub.s32 5, %v323
        %v325 = vrot.slane %v176, %v324
        %327 = vbcast.lane.b32.xlu0 %v325, 256
        %v328 = vpop.permute.xlu0 %327
        %s330 = sor.u32 256, 8
        %331 = vbcast.lane.b32.xlu0 %v325, %s330
        %v332 = vpop.permute.xlu0 %331
        %v333 = vlaneseq
        %v334 = vshrl.u32 %v333, 7
        %v335 = vsub.s32 6, %v334
        %v336 = vrot.slane %v176, %v335
        %338 = vbcast.lane.b32.xlu0 %v336, 256
        %v339 = vpop.permute.xlu0 %338
        %s341 = sor.u32 256, 8
        %342 = vbcast.lane.b32.xlu0 %v336, %s341
        %v343 = vpop.permute.xlu0 %342
        %v344 = vlaneseq
        %v345 = vshrl.u32 %v344, 7
        %v346 = vsub.s32 7, %v345
        %v347 = vrot.slane %v176, %v346
        %349 = vbcast.lane.b32.xlu0 %v347, 256
        %v350 = vpop.permute.xlu0 %349
        %s352 = sor.u32 256, 8
        %353 = vbcast.lane.b32.xlu0 %v347, %s352
        %v354 = vpop.permute.xlu0 %353
        %vm355 = vcmask 7168
        %v356 = vsel %vm355, %v185, %v273
        %v357 = vsel %vm355, %v189, %v277
        %v358 = vsel %vm355, %v196, %v284
        %v359 = vsel %vm355, %v200, %v288
        %v360 = vsel %vm355, %v207, %v295
        %v361 = vsel %vm355, %v211, %v299
        %v362 = vsel %vm355, %v218, %v306
        %v363 = vsel %vm355, %v222, %v310
        %v364 = vsel %vm355, %v229, %v317
        %v365 = vsel %vm355, %v233, %v321
        %v366 = vsel %vm355, %v240, %v328
        %v367 = vsel %vm355, %v244, %v332
        %v368 = vsel %vm355, %v251, %v339
        %v369 = vsel %vm355, %v255, %v343
        %v370 = vsel %vm355, %v262, %v350
        %v371 = vsel %vm355, %v266, %v354
        %v372 = vcombine.low %v356, %v360
        %v373 = vcombine.high %v356, %v360
        %v375 = vunpack.c.l.s4 1983009808
        %v376 = vunpack.c.0.s8 %v375
        %v377 = vlaneseq
        %v378 = vshrl.u32 %v377, 7
        %v379 = vsub.s32 %v376, %v378
        %v380 = vrot.slane %v372, %v379
        %v382 = vunpack.c.l.s4 1983009808
        %v383 = vunpack.c.0.s8 %v382
        %v384 = vlaneseq
        %v385 = vshrl.u32 %v384, 7
        %v386 = vsub.s32 %v383, %v385
        %v387 = vrot.slane %v373, %v386
        %v388 = vcombine.low %v358, %v362
        %v389 = vcombine.high %v358, %v362
        %v391 = vunpack.c.l.s4 1983009808
        %v392 = vunpack.c.0.s8 %v391
        %v393 = vlaneseq
        %v394 = vshrl.u32 %v393, 7
        %v395 = vsub.s32 %v392, %v394
        %v396 = vrot.slane %v388, %v395
        %v398 = vunpack.c.l.s4 1983009808
        %v399 = vunpack.c.0.s8 %v398
        %v400 = vlaneseq
        %v401 = vshrl.u32 %v400, 7
        %v402 = vsub.s32 %v399, %v401
        %v403 = vrot.slane %v389, %v402
        %v404 = vcombine.low %v364, %v368
        %v405 = vcombine.high %v364, %v368
        %v407 = vunpack.c.l.s4 1983009808
        %v408 = vunpack.c.0.s8 %v407
        %v409 = vlaneseq
        %v410 = vshrl.u32 %v409, 7
        %v411 = vsub.s32 %v408, %v410
        %v412 = vrot.slane %v404, %v411
        %v414 = vunpack.c.l.s4 1983009808
        %v415 = vunpack.c.0.s8 %v414
        %v416 = vlaneseq
        %v417 = vshrl.u32 %v416, 7
        %v418 = vsub.s32 %v415, %v417
        %v419 = vrot.slane %v405, %v418
        %v420 = vcombine.low %v366, %v370
        %v421 = vcombine.high %v366, %v370
        %v423 = vunpack.c.l.s4 1983009808
        %v424 = vunpack.c.0.s8 %v423
        %v425 = vlaneseq
        %v426 = vshrl.u32 %v425, 7
        %v427 = vsub.s32 %v424, %v426
        %v428 = vrot.slane %v420, %v427
        %v430 = vunpack.c.l.s4 1983009808
        %v431 = vunpack.c.0.s8 %v430
        %v432 = vlaneseq
        %v433 = vshrl.u32 %v432, 7
        %v434 = vsub.s32 %v431, %v433
        %v435 = vrot.slane %v421, %v434
        %v436 = vcombine.low %v380, %v396
        %v437 = vcombine.high %v380, %v396
        %v439 = vunpack.c.l.s4 1934713408
        %v440 = vunpack.c.0.s8 %v439
        %v441 = vlaneseq
        %v442 = vshrl.u32 %v441, 7
        %v443 = vsub.s32 %v440, %v442
        %v444 = vrot.slane %v436, %v443
        %v446 = vunpack.c.l.s4 1934713408
        %v447 = vunpack.c.0.s8 %v446
        %v448 = vlaneseq
        %v449 = vshrl.u32 %v448, 7
        %v450 = vsub.s32 %v447, %v449
        %v451 = vrot.slane %v437, %v450
        %v452 = vcombine.low %v387, %v403
        %v453 = vcombine.high %v387, %v403
        %v455 = vunpack.c.l.s4 1934713408
        %v456 = vunpack.c.0.s8 %v455
        %v457 = vlaneseq
        %v458 = vshrl.u32 %v457, 7
        %v459 = vsub.s32 %v456, %v458
        %v460 = vrot.slane %v452, %v459
        %v462 = vunpack.c.l.s4 1934713408
        %v463 = vunpack.c.0.s8 %v462
        %v464 = vlaneseq
        %v465 = vshrl.u32 %v464, 7
        %v466 = vsub.s32 %v463, %v465
        %v467 = vrot.slane %v453, %v466
        %v468 = vcombine.low %v412, %v428
        %v469 = vcombine.high %v412, %v428
        %v471 = vunpack.c.l.s4 1934713408
        %v472 = vunpack.c.0.s8 %v471
        %v473 = vlaneseq
        %v474 = vshrl.u32 %v473, 7
        %v475 = vsub.s32 %v472, %v474
        %v476 = vrot.slane %v468, %v475
        %v478 = vunpack.c.l.s4 1934713408
        %v479 = vunpack.c.0.s8 %v478
        %v480 = vlaneseq
        %v481 = vshrl.u32 %v480, 7
        %v482 = vsub.s32 %v479, %v481
        %v483 = vrot.slane %v469, %v482
        %v484 = vcombine.low %v419, %v435
        %v485 = vcombine.high %v419, %v435
        %v487 = vunpack.c.l.s4 1934713408
        %v488 = vunpack.c.0.s8 %v487
        %v489 = vlaneseq
        %v490 = vshrl.u32 %v489, 7
        %v491 = vsub.s32 %v488, %v490
        %v492 = vrot.slane %v484, %v491
        %v494 = vunpack.c.l.s4 1934713408
        %v495 = vunpack.c.0.s8 %v494
        %v496 = vlaneseq
        %v497 = vshrl.u32 %v496, 7
        %v498 = vsub.s32 %v495, %v497
        %v499 = vrot.slane %v485, %v498
        %v500 = vcombine.low %v444, %v476
        %v501 = vcombine.high %v444, %v476
        %v502 = vcombine.low %v451, %v483
        %v503 = vcombine.high %v451, %v483
        %v504 = vcombine.low %v460, %v492
        %v505 = vcombine.high %v460, %v492
        %v506 = vcombine.low %v467, %v499
        %v507 = vcombine.high %v467, %v499
        %v508 = vcombine.low %v357, %v361
        %v509 = vcombine.high %v357, %v361
        %v511 = vunpack.c.l.s4 1983009808
        %v512 = vunpack.c.0.s8 %v511
        %v513 = vlaneseq
        %v514 = vshrl.u32 %v513, 7
        %v515 = vsub.s32 %v512, %v514
        %v516 = vrot.slane %v508, %v515
        %v518 = vunpack.c.l.s4 1983009808
        %v519 = vunpack.c.0.s8 %v518
        %v520 = vlaneseq
        %v521 = vshrl.u32 %v520, 7
        %v522 = vsub.s32 %v519, %v521
        %v523 = vrot.slane %v509, %v522
        %v524 = vcombine.low %v359, %v363
        %v525 = vcombine.high %v359, %v363
        %v527 = vunpack.c.l.s4 1983009808
        %v528 = vunpack.c.0.s8 %v527
        %v529 = vlaneseq
        %v530 = vshrl.u32 %v529, 7
        %v531 = vsub.s32 %v528, %v530
        %v532 = vrot.slane %v524, %v531
        %v534 = vunpack.c.l.s4 1983009808
        %v535 = vunpack.c.0.s8 %v534
        %v536 = vlaneseq
        %v537 = vshrl.u32 %v536, 7
        %v538 = vsub.s32 %v535, %v537
        %v539 = vrot.slane %v525, %v538
        %v540 = vcombine.low %v365, %v369
        %v541 = vcombine.high %v365, %v369
        %v543 = vunpack.c.l.s4 1983009808
        %v544 = vunpack.c.0.s8 %v543
        %v545 = vlaneseq
        %v546 = vshrl.u32 %v545, 7
        %v547 = vsub.s32 %v544, %v546
        %v548 = vrot.slane %v540, %v547
        %v550 = vunpack.c.l.s4 1983009808
        %v551 = vunpack.c.0.s8 %v550
        %v552 = vlaneseq
        %v553 = vshrl.u32 %v552, 7
        %v554 = vsub.s32 %v551, %v553
        %v555 = vrot.slane %v541, %v554
        %v556 = vcombine.low %v367, %v371
        %v557 = vcombine.high %v367, %v371
        %v559 = vunpack.c.l.s4 1983009808
        %v560 = vunpack.c.0.s8 %v559
        %v561 = vlaneseq
        %v562 = vshrl.u32 %v561, 7
        %v563 = vsub.s32 %v560, %v562
        %v564 = vrot.slane %v556, %v563
        %v566 = vunpack.c.l.s4 1983009808
        %v567 = vunpack.c.0.s8 %v566
        %v568 = vlaneseq
        %v569 = vshrl.u32 %v568, 7
        %v570 = vsub.s32 %v567, %v569
        %v571 = vrot.slane %v557, %v570
        %v572 = vcombine.low %v516, %v532
        %v573 = vcombine.high %v516, %v532
        %v575 = vunpack.c.l.s4 1934713408
        %v576 = vunpack.c.0.s8 %v575
        %v577 = vlaneseq
        %v578 = vshrl.u32 %v577, 7
        %v579 = vsub.s32 %v576, %v578
        %v580 = vrot.slane %v572, %v579
        %v582 = vunpack.c.l.s4 1934713408
        %v583 = vunpack.c.0.s8 %v582
        %v584 = vlaneseq
        %v585 = vshrl.u32 %v584, 7
        %v586 = vsub.s32 %v583, %v585
        %v587 = vrot.slane %v573, %v586
        %v588 = vcombine.low %v523, %v539
        %v589 = vcombine.high %v523, %v539
        %v591 = vunpack.c.l.s4 1934713408
        %v592 = vunpack.c.0.s8 %v591
        %v593 = vlaneseq
        %v594 = vshrl.u32 %v593, 7
        %v595 = vsub.s32 %v592, %v594
        %v596 = vrot.slane %v588, %v595
        %v598 = vunpack.c.l.s4 1934713408
        %v599 = vunpack.c.0.s8 %v598
        %v600 = vlaneseq
        %v601 = vshrl.u32 %v600, 7
        %v602 = vsub.s32 %v599, %v601
        %v603 = vrot.slane %v589, %v602
        %v604 = vcombine.low %v548, %v564
        %v605 = vcombine.high %v548, %v564
        %v607 = vunpack.c.l.s4 1934713408
        %v608 = vunpack.c.0.s8 %v607
        %v609 = vlaneseq
        %v610 = vshrl.u32 %v609, 7
        %v611 = vsub.s32 %v608, %v610
        %v612 = vrot.slane %v604, %v611
        %v614 = vunpack.c.l.s4 1934713408
        %v615 = vunpack.c.0.s8 %v614
        %v616 = vlaneseq
        %v617 = vshrl.u32 %v616, 7
        %v618 = vsub.s32 %v615, %v617
        %v619 = vrot.slane %v605, %v618
        %v620 = vcombine.low %v555, %v571
        %v621 = vcombine.high %v555, %v571
        %v623 = vunpack.c.l.s4 1934713408
        %v624 = vunpack.c.0.s8 %v623
        %v625 = vlaneseq
        %v626 = vshrl.u32 %v625, 7
        %v627 = vsub.s32 %v624, %v626
        %v628 = vrot.slane %v620, %v627
        %v630 = vunpack.c.l.s4 1934713408
        %v631 = vunpack.c.0.s8 %v630
        %v632 = vlaneseq
        %v633 = vshrl.u32 %v632, 7
        %v634 = vsub.s32 %v631, %v633
        %v635 = vrot.slane %v621, %v634
        %v636 = vcombine.low %v580, %v612
        %v637 = vcombine.high %v580, %v612
        %v638 = vcombine.low %v587, %v619
        %v639 = vcombine.high %v587, %v619
        %v640 = vcombine.low %v596, %v628
        %v641 = vcombine.high %v596, %v628
        %v642 = vcombine.low %v603, %v635
        %v643 = vcombine.high %v603, %v635
        %645 = vrot.lane.b32.xlu0 %v501, 2
        %v646 = vpop.permute.xlu0 %645
        %649 = vrot.lane.b32.xlu0 %v502, 4
        %v650 = vpop.permute.xlu0 %649
        %653 = vrot.lane.b32.xlu0 %v503, 6
        %v654 = vpop.permute.xlu0 %653
        %657 = vrot.lane.b32.xlu0 %v504, 8
        %v658 = vpop.permute.xlu0 %657
        %661 = vrot.lane.b32.xlu0 %v505, 10
        %v662 = vpop.permute.xlu0 %661
        %665 = vrot.lane.b32.xlu0 %v506, 12
        %v666 = vpop.permute.xlu0 %665
        %669 = vrot.lane.b32.xlu0 %v507, 14
        %v670 = vpop.permute.xlu0 %669
        %673 = vrot.lane.b32.xlu0 %v636, 16
        %v674 = vpop.permute.xlu0 %673
        %677 = vrot.lane.b32.xlu0 %v637, 18
        %v678 = vpop.permute.xlu0 %677
        %681 = vrot.lane.b32.xlu0 %v638, 20
        %v682 = vpop.permute.xlu0 %681
        %685 = vrot.lane.b32.xlu0 %v639, 22
        %v686 = vpop.permute.xlu0 %685
        %689 = vrot.lane.b32.xlu0 %v640, 24
        %v690 = vpop.permute.xlu0 %689
        %693 = vrot.lane.b32.xlu0 %v641, 26
        %v694 = vpop.permute.xlu0 %693
        %697 = vrot.lane.b32.xlu0 %v642, 28
        %v698 = vpop.permute.xlu0 %697
        %701 = vrot.lane.b32.xlu0 %v643, 30
        %v702 = vpop.permute.xlu0 %701
        %vm704 = vcmask 15360
        %v705 = vsel %vm704, %v500, %v646
        %vm706 = vcmask 31744
        %v707 = vsel %vm706, %v705, %v650
        %vm708 = vcmask 48128
        %v709 = vsel %vm708, %v707, %v654
        %vm710 = vcmask 64512
        %v711 = vsel %vm710, %v709, %v658
        %vm712 = vcmask 80896
        %v713 = vsel %vm712, %v711, %v662
        %vm714 = vcmask 97280
        %v715 = vsel %vm714, %v713, %v666
        %vm716 = vcmask 113664
        %v717 = vsel %vm716, %v715, %v670
        %vm718 = vcmask 130048
        %v719 = vsel %vm718, %v717, %v674
        %vm720 = vcmask 146432
        %v721 = vsel %vm720, %v719, %v678
        %vm722 = vcmask 162816
        %v723 = vsel %vm722, %v721, %v682
        %vm724 = vcmask 179200
        %v725 = vsel %vm724, %v723, %v686
        %vm726 = vcmask 195584
        %v727 = vsel %vm726, %v725, %v690
        %vm728 = vcmask 211968
        %v729 = vsel %vm728, %v727, %v694
        %vm730 = vcmask 228352
        %v731 = vsel %vm730, %v729, %v698
        %vm732 = vcmask 244736
        %v733 = vsel %vm732, %v731, %v702
        %v734 = vlaneseq
        %v735 = vshrl.u32 %v734, 7
        %v736 = vsub.s32 0, %v735
        %v737 = vrot.slane %v177, %v736
        %739 = vbcast.lane.b32.xlu0 %v737, 256
        %v740 = vpop.permute.xlu0 %739
        %s742 = sor.u32 256, 8
        %743 = vbcast.lane.b32.xlu0 %v737, %s742
        %v744 = vpop.permute.xlu0 %743
        %v745 = vlaneseq
        %v746 = vshrl.u32 %v745, 7
        %v747 = vsub.s32 1, %v746
        %v748 = vrot.slane %v177, %v747
        %750 = vbcast.lane.b32.xlu0 %v748, 256
        %v751 = vpop.permute.xlu0 %750
        %s753 = sor.u32 256, 8
        %754 = vbcast.lane.b32.xlu0 %v748, %s753
        %v755 = vpop.permute.xlu0 %754
        %v756 = vlaneseq
        %v757 = vshrl.u32 %v756, 7
        %v758 = vsub.s32 2, %v757
        %v759 = vrot.slane %v177, %v758
        %761 = vbcast.lane.b32.xlu0 %v759, 256
        %v762 = vpop.permute.xlu0 %761
        %s764 = sor.u32 256, 8
        %765 = vbcast.lane.b32.xlu0 %v759, %s764
        %v766 = vpop.permute.xlu0 %765
        %v767 = vlaneseq
        %v768 = vshrl.u32 %v767, 7
        %v769 = vsub.s32 3, %v768
        %v770 = vrot.slane %v177, %v769
        %772 = vbcast.lane.b32.xlu0 %v770, 256
        %v773 = vpop.permute.xlu0 %772
        %s775 = sor.u32 256, 8
        %776 = vbcast.lane.b32.xlu0 %v770, %s775
        %v777 = vpop.permute.xlu0 %776
        %v778 = vlaneseq
        %v779 = vshrl.u32 %v778, 7
        %v780 = vsub.s32 4, %v779
        %v781 = vrot.slane %v177, %v780
        %783 = vbcast.lane.b32.xlu0 %v781, 256
        %v784 = vpop.permute.xlu0 %783
        %s786 = sor.u32 256, 8
        %787 = vbcast.lane.b32.xlu0 %v781, %s786
        %v788 = vpop.permute.xlu0 %787
        %v789 = vlaneseq
        %v790 = vshrl.u32 %v789, 7
        %v791 = vsub.s32 5, %v790
        %v792 = vrot.slane %v177, %v791
        %794 = vbcast.lane.b32.xlu0 %v792, 256
        %v795 = vpop.permute.xlu0 %794
        %s797 = sor.u32 256, 8
        %798 = vbcast.lane.b32.xlu0 %v792, %s797
        %v799 = vpop.permute.xlu0 %798
        %v800 = vlaneseq
        %v801 = vshrl.u32 %v800, 7
        %v802 = vsub.s32 6, %v801
        %v803 = vrot.slane %v177, %v802
        %805 = vbcast.lane.b32.xlu0 %v803, 256
        %v806 = vpop.permute.xlu0 %805
        %s808 = sor.u32 256, 8
        %809 = vbcast.lane.b32.xlu0 %v803, %s808
        %v810 = vpop.permute.xlu0 %809
        %v811 = vlaneseq
        %v812 = vshrl.u32 %v811, 7
        %v813 = vsub.s32 7, %v812
        %v814 = vrot.slane %v177, %v813
        %816 = vbcast.lane.b32.xlu0 %v814, 256
        %v817 = vpop.permute.xlu0 %816
        %s819 = sor.u32 256, 8
        %820 = vbcast.lane.b32.xlu0 %v814, %s819
        %v821 = vpop.permute.xlu0 %820
        %v822 = vlaneseq
        %v823 = vshrl.u32 %v822, 7
        %v824 = vsub.s32 0, %v823
        %v825 = vrot.slane %v178, %v824
        %827 = vbcast.lane.b32.xlu0 %v825, 256
        %v828 = vpop.permute.xlu0 %827
        %s830 = sor.u32 256, 8
        %831 = vbcast.lane.b32.xlu0 %v825, %s830
        %v832 = vpop.permute.xlu0 %831
        %v833 = vlaneseq
        %v834 = vshrl.u32 %v833, 7
        %v835 = vsub.s32 1, %v834
        %v836 = vrot.slane %v178, %v835
        %838 = vbcast.lane.b32.xlu0 %v836, 256
        %v839 = vpop.permute.xlu0 %838
        %s841 = sor.u32 256, 8
        %842 = vbcast.lane.b32.xlu0 %v836, %s841
        %v843 = vpop.permute.xlu0 %842
        %v844 = vlaneseq
        %v845 = vshrl.u32 %v844, 7
        %v846 = vsub.s32 2, %v845
        %v847 = vrot.slane %v178, %v846
        %849 = vbcast.lane.b32.xlu0 %v847, 256
        %v850 = vpop.permute.xlu0 %849
        %s852 = sor.u32 256, 8
        %853 = vbcast.lane.b32.xlu0 %v847, %s852
        %v854 = vpop.permute.xlu0 %853
        %v855 = vlaneseq
        %v856 = vshrl.u32 %v855, 7
        %v857 = vsub.s32 3, %v856
        %v858 = vrot.slane %v178, %v857
        %860 = vbcast.lane.b32.xlu0 %v858, 256
        %v861 = vpop.permute.xlu0 %860
        %s863 = sor.u32 256, 8
        %864 = vbcast.lane.b32.xlu0 %v858, %s863
        %v865 = vpop.permute.xlu0 %864
        %v866 = vlaneseq
        %v867 = vshrl.u32 %v866, 7
        %v868 = vsub.s32 4, %v867
        %v869 = vrot.slane %v178, %v868
        %871 = vbcast.lane.b32.xlu0 %v869, 256
        %v872 = vpop.permute.xlu0 %871
        %s874 = sor.u32 256, 8
        %875 = vbcast.lane.b32.xlu0 %v869, %s874
        %v876 = vpop.permute.xlu0 %875
        %v877 = vlaneseq
        %v878 = vshrl.u32 %v877, 7
        %v879 = vsub.s32 5, %v878
        %v880 = vrot.slane %v178, %v879
        %882 = vbcast.lane.b32.xlu0 %v880, 256
        %v883 = vpop.permute.xlu0 %882
        %s885 = sor.u32 256, 8
        %886 = vbcast.lane.b32.xlu0 %v880, %s885
        %v887 = vpop.permute.xlu0 %886
        %v888 = vlaneseq
        %v889 = vshrl.u32 %v888, 7
        %v890 = vsub.s32 6, %v889
        %v891 = vrot.slane %v178, %v890
        %893 = vbcast.lane.b32.xlu0 %v891, 256
        %v894 = vpop.permute.xlu0 %893
        %s896 = sor.u32 256, 8
        %897 = vbcast.lane.b32.xlu0 %v891, %s896
        %v898 = vpop.permute.xlu0 %897
        %v899 = vlaneseq
        %v900 = vshrl.u32 %v899, 7
        %v901 = vsub.s32 7, %v900
        %v902 = vrot.slane %v178, %v901
        %904 = vbcast.lane.b32.xlu0 %v902, 256
        %v905 = vpop.permute.xlu0 %904
        %s907 = sor.u32 256, 8
        %908 = vbcast.lane.b32.xlu0 %v902, %s907
        %v909 = vpop.permute.xlu0 %908
        %v910 = vsel %vm355, %v740, %v828
        %v911 = vsel %vm355, %v744, %v832
        %v912 = vsel %vm355, %v751, %v839
        %v913 = vsel %vm355, %v755, %v843
        %v914 = vsel %vm355, %v762, %v850
        %v915 = vsel %vm355, %v766, %v854
        %v916 = vsel %vm355, %v773, %v861
        %v917 = vsel %vm355, %v777, %v865
        %v918 = vsel %vm355, %v784, %v872
        %v919 = vsel %vm355, %v788, %v876
        %v920 = vsel %vm355, %v795, %v883
        %v921 = vsel %vm355, %v799, %v887
        %v922 = vsel %vm355, %v806, %v894
        %v923 = vsel %vm355, %v810, %v898
        %v924 = vsel %vm355, %v817, %v905
        %v925 = vsel %vm355, %v821, %v909
        %v926 = vcombine.low %v910, %v914
        %v927 = vcombine.high %v910, %v914
        %v929 = vunpack.c.l.s4 1983009808
        %v930 = vunpack.c.0.s8 %v929
        %v931 = vlaneseq
        %v932 = vshrl.u32 %v931, 7
        %v933 = vsub.s32 %v930, %v932
        %v934 = vrot.slane %v926, %v933
        %v936 = vunpack.c.l.s4 1983009808
        %v937 = vunpack.c.0.s8 %v936
        %v938 = vlaneseq
        %v939 = vshrl.u32 %v938, 7
        %v940 = vsub.s32 %v937, %v939
        %v941 = vrot.slane %v927, %v940
        %v942 = vcombine.low %v912, %v916
        %v943 = vcombine.high %v912, %v916
        %v945 = vunpack.c.l.s4 1983009808
        %v946 = vunpack.c.0.s8 %v945
        %v947 = vlaneseq
        %v948 = vshrl.u32 %v947, 7
        %v949 = vsub.s32 %v946, %v948
        %v950 = vrot.slane %v942, %v949
        %v952 = vunpack.c.l.s4 1983009808
        %v953 = vunpack.c.0.s8 %v952
        %v954 = vlaneseq
        %v955 = vshrl.u32 %v954, 7
        %v956 = vsub.s32 %v953, %v955
        %v957 = vrot.slane %v943, %v956
        %v958 = vcombine.low %v918, %v922
        %v959 = vcombine.high %v918, %v922
        %v961 = vunpack.c.l.s4 1983009808
        %v962 = vunpack.c.0.s8 %v961
        %v963 = vlaneseq
        %v964 = vshrl.u32 %v963, 7
        %v965 = vsub.s32 %v962, %v964
        %v966 = vrot.slane %v958, %v965
        %v968 = vunpack.c.l.s4 1983009808
        %v969 = vunpack.c.0.s8 %v968
        %v970 = vlaneseq
        %v971 = vshrl.u32 %v970, 7
        %v972 = vsub.s32 %v969, %v971
        %v973 = vrot.slane %v959, %v972
        %v974 = vcombine.low %v920, %v924
        %v975 = vcombine.high %v920, %v924
        %v977 = vunpack.c.l.s4 1983009808
        %v978 = vunpack.c.0.s8 %v977
        %v979 = vlaneseq
        %v980 = vshrl.u32 %v979, 7
        %v981 = vsub.s32 %v978, %v980
        %v982 = vrot.slane %v974, %v981
        %v984 = vunpack.c.l.s4 1983009808
        %v985 = vunpack.c.0.s8 %v984
        %v986 = vlaneseq
        %v987 = vshrl.u32 %v986, 7
        %v988 = vsub.s32 %v985, %v987
        %v989 = vrot.slane %v975, %v988
        %v990 = vcombine.low %v934, %v950
        %v991 = vcombine.high %v934, %v950
        %v993 = vunpack.c.l.s4 1934713408
        %v994 = vunpack.c.0.s8 %v993
        %v995 = vlaneseq
        %v996 = vshrl.u32 %v995, 7
        %v997 = vsub.s32 %v994, %v996
        %v998 = vrot.slane %v990, %v997
        %v1000 = vunpack.c.l.s4 1934713408
        %v1001 = vunpack.c.0.s8 %v1000
        %v1002 = vlaneseq
        %v1003 = vshrl.u32 %v1002, 7
        %v1004 = vsub.s32 %v1001, %v1003
        %v1005 = vrot.slane %v991, %v1004
        %v1006 = vcombine.low %v941, %v957
        %v1007 = vcombine.high %v941, %v957
        %v1009 = vunpack.c.l.s4 1934713408
        %v1010 = vunpack.c.0.s8 %v1009
        %v1011 = vlaneseq
        %v1012 = vshrl.u32 %v1011, 7
        %v1013 = vsub.s32 %v1010, %v1012
        %v1014 = vrot.slane %v1006, %v1013
        %v1016 = vunpack.c.l.s4 1934713408
        %v1017 = vunpack.c.0.s8 %v1016
        %v1018 = vlaneseq
        %v1019 = vshrl.u32 %v1018, 7
        %v1020 = vsub.s32 %v1017, %v1019
        %v1021 = vrot.slane %v1007, %v1020
        %v1022 = vcombine.low %v966, %v982
        %v1023 = vcombine.high %v966, %v982
        %v1025 = vunpack.c.l.s4 1934713408
        %v1026 = vunpack.c.0.s8 %v1025
        %v1027 = vlaneseq
        %v1028 = vshrl.u32 %v1027, 7
        %v1029 = vsub.s32 %v1026, %v1028
        %v1030 = vrot.slane %v1022, %v1029
        %v1032 = vunpack.c.l.s4 1934713408
        %v1033 = vunpack.c.0.s8 %v1032
        %v1034 = vlaneseq
        %v1035 = vshrl.u32 %v1034, 7
        %v1036 = vsub.s32 %v1033, %v1035
        %v1037 = vrot.slane %v1023, %v1036
        %v1038 = vcombine.low %v973, %v989
        %v1039 = vcombine.high %v973, %v989
        %v1041 = vunpack.c.l.s4 1934713408
        %v1042 = vunpack.c.0.s8 %v1041
        %v1043 = vlaneseq
        %v1044 = vshrl.u32 %v1043, 7
        %v1045 = vsub.s32 %v1042, %v1044
        %v1046 = vrot.slane %v1038, %v1045
        %v1048 = vunpack.c.l.s4 1934713408
        %v1049 = vunpack.c.0.s8 %v1048
        %v1050 = vlaneseq
        %v1051 = vshrl.u32 %v1050, 7
        %v1052 = vsub.s32 %v1049, %v1051
        %v1053 = vrot.slane %v1039, %v1052
        %v1054 = vcombine.low %v998, %v1030
        %v1055 = vcombine.high %v998, %v1030
        %v1056 = vcombine.low %v1005, %v1037
        %v1057 = vcombine.high %v1005, %v1037
        %v1058 = vcombine.low %v1014, %v1046
        %v1059 = vcombine.high %v1014, %v1046
        %v1060 = vcombine.low %v1021, %v1053
        %v1061 = vcombine.high %v1021, %v1053
        %v1062 = vcombine.low %v911, %v915
        %v1063 = vcombine.high %v911, %v915
        %v1065 = vunpack.c.l.s4 1983009808
        %v1066 = vunpack.c.0.s8 %v1065
        %v1067 = vlaneseq
        %v1068 = vshrl.u32 %v1067, 7
        %v1069 = vsub.s32 %v1066, %v1068
        %v1070 = vrot.slane %v1062, %v1069
        %v1072 = vunpack.c.l.s4 1983009808
        %v1073 = vunpack.c.0.s8 %v1072
        %v1074 = vlaneseq
        %v1075 = vshrl.u32 %v1074, 7
        %v1076 = vsub.s32 %v1073, %v1075
        %v1077 = vrot.slane %v1063, %v1076
        %v1078 = vcombine.low %v913, %v917
        %v1079 = vcombine.high %v913, %v917
        %v1081 = vunpack.c.l.s4 1983009808
        %v1082 = vunpack.c.0.s8 %v1081
        %v1083 = vlaneseq
        %v1084 = vshrl.u32 %v1083, 7
        %v1085 = vsub.s32 %v1082, %v1084
        %v1086 = vrot.slane %v1078, %v1085
        %v1088 = vunpack.c.l.s4 1983009808
        %v1089 = vunpack.c.0.s8 %v1088
        %v1090 = vlaneseq
        %v1091 = vshrl.u32 %v1090, 7
        %v1092 = vsub.s32 %v1089, %v1091
        %v1093 = vrot.slane %v1079, %v1092
        %v1094 = vcombine.low %v919, %v923
        %v1095 = vcombine.high %v919, %v923
        %v1097 = vunpack.c.l.s4 1983009808
        %v1098 = vunpack.c.0.s8 %v1097
        %v1099 = vlaneseq
        %v1100 = vshrl.u32 %v1099, 7
        %v1101 = vsub.s32 %v1098, %v1100
        %v1102 = vrot.slane %v1094, %v1101
        %v1104 = vunpack.c.l.s4 1983009808
        %v1105 = vunpack.c.0.s8 %v1104
        %v1106 = vlaneseq
        %v1107 = vshrl.u32 %v1106, 7
        %v1108 = vsub.s32 %v1105, %v1107
        %v1109 = vrot.slane %v1095, %v1108
        %v1110 = vcombine.low %v921, %v925
        %v1111 = vcombine.high %v921, %v925
        %v1113 = vunpack.c.l.s4 1983009808
        %v1114 = vunpack.c.0.s8 %v1113
        %v1115 = vlaneseq
        %v1116 = vshrl.u32 %v1115, 7
        %v1117 = vsub.s32 %v1114, %v1116
        %v1118 = vrot.slane %v1110, %v1117
        %v1120 = vunpack.c.l.s4 1983009808
        %v1121 = vunpack.c.0.s8 %v1120
        %v1122 = vlaneseq
        %v1123 = vshrl.u32 %v1122, 7
        %v1124 = vsub.s32 %v1121, %v1123
        %v1125 = vrot.slane %v1111, %v1124
        %v1126 = vcombine.low %v1070, %v1086
        %v1127 = vcombine.high %v1070, %v1086
        %v1129 = vunpack.c.l.s4 1934713408
        %v1130 = vunpack.c.0.s8 %v1129
        %v1131 = vlaneseq
        %v1132 = vshrl.u32 %v1131, 7
        %v1133 = vsub.s32 %v1130, %v1132
        %v1134 = vrot.slane %v1126, %v1133
        %v1136 = vunpack.c.l.s4 1934713408
        %v1137 = vunpack.c.0.s8 %v1136
        %v1138 = vlaneseq
        %v1139 = vshrl.u32 %v1138, 7
        %v1140 = vsub.s32 %v1137, %v1139
        %v1141 = vrot.slane %v1127, %v1140
        %v1142 = vcombine.low %v1077, %v1093
        %v1143 = vcombine.high %v1077, %v1093
        %v1145 = vunpack.c.l.s4 1934713408
        %v1146 = vunpack.c.0.s8 %v1145
        %v1147 = vlaneseq
        %v1148 = vshrl.u32 %v1147, 7
        %v1149 = vsub.s32 %v1146, %v1148
        %v1150 = vrot.slane %v1142, %v1149
        %v1152 = vunpack.c.l.s4 1934713408
        %v1153 = vunpack.c.0.s8 %v1152
        %v1154 = vlaneseq
        %v1155 = vshrl.u32 %v1154, 7
        %v1156 = vsub.s32 %v1153, %v1155
        %v1157 = vrot.slane %v1143, %v1156
        %v1158 = vcombine.low %v1102, %v1118
        %v1159 = vcombine.high %v1102, %v1118
        %v1161 = vunpack.c.l.s4 1934713408
        %v1162 = vunpack.c.0.s8 %v1161
        %v1163 = vlaneseq
        %v1164 = vshrl.u32 %v1163, 7
        %v1165 = vsub.s32 %v1162, %v1164
        %v1166 = vrot.slane %v1158, %v1165
        %v1168 = vunpack.c.l.s4 1934713408
        %v1169 = vunpack.c.0.s8 %v1168
        %v1170 = vlaneseq
        %v1171 = vshrl.u32 %v1170, 7
        %v1172 = vsub.s32 %v1169, %v1171
        %v1173 = vrot.slane %v1159, %v1172
        %v1174 = vcombine.low %v1109, %v1125
        %v1175 = vcombine.high %v1109, %v1125
        %v1177 = vunpack.c.l.s4 1934713408
        %v1178 = vunpack.c.0.s8 %v1177
        %v1179 = vlaneseq
        %v1180 = vshrl.u32 %v1179, 7
        %v1181 = vsub.s32 %v1178, %v1180
        %v1182 = vrot.slane %v1174, %v1181
        %v1184 = vunpack.c.l.s4 1934713408
        %v1185 = vunpack.c.0.s8 %v1184
        %v1186 = vlaneseq
        %v1187 = vshrl.u32 %v1186, 7
        %v1188 = vsub.s32 %v1185, %v1187
        %v1189 = vrot.slane %v1175, %v1188
        %v1190 = vcombine.low %v1134, %v1166
        %v1191 = vcombine.high %v1134, %v1166
        %v1192 = vcombine.low %v1141, %v1173
        %v1193 = vcombine.high %v1141, %v1173
        %v1194 = vcombine.low %v1150, %v1182
        %v1195 = vcombine.high %v1150, %v1182
        %v1196 = vcombine.low %v1157, %v1189
        %v1197 = vcombine.high %v1157, %v1189
        %1199 = vrot.lane.b32.xlu0 %v1055, 2
        %v1200 = vpop.permute.xlu0 %1199
        %1203 = vrot.lane.b32.xlu0 %v1056, 4
        %v1204 = vpop.permute.xlu0 %1203
        %1207 = vrot.lane.b32.xlu0 %v1057, 6
        %v1208 = vpop.permute.xlu0 %1207
        %1211 = vrot.lane.b32.xlu0 %v1058, 8
        %v1212 = vpop.permute.xlu0 %1211
        %1215 = vrot.lane.b32.xlu0 %v1059, 10
        %v1216 = vpop.permute.xlu0 %1215
        %1219 = vrot.lane.b32.xlu0 %v1060, 12
        %v1220 = vpop.permute.xlu0 %1219
        %1223 = vrot.lane.b32.xlu0 %v1061, 14
        %v1224 = vpop.permute.xlu0 %1223
        %1227 = vrot.lane.b32.xlu0 %v1190, 16
        %v1228 = vpop.permute.xlu0 %1227
        %1231 = vrot.lane.b32.xlu0 %v1191, 18
        %v1232 = vpop.permute.xlu0 %1231
        %1235 = vrot.lane.b32.xlu0 %v1192, 20
        %v1236 = vpop.permute.xlu0 %1235
        %1239 = vrot.lane.b32.xlu0 %v1193, 22
        %v1240 = vpop.permute.xlu0 %1239
        %1243 = vrot.lane.b32.xlu0 %v1194, 24
        %v1244 = vpop.permute.xlu0 %1243
        %1247 = vrot.lane.b32.xlu0 %v1195, 26
        %v1248 = vpop.permute.xlu0 %1247
        %1251 = vrot.lane.b32.xlu0 %v1196, 28
        %v1252 = vpop.permute.xlu0 %1251
        %1255 = vrot.lane.b32.xlu0 %v1197, 30
        %v1256 = vpop.permute.xlu0 %1255
        %v1258 = vsel %vm704, %v1054, %v1200
        %v1259 = vsel %vm706, %v1258, %v1204
        %v1260 = vsel %vm708, %v1259, %v1208
        %v1261 = vsel %vm710, %v1260, %v1212
        %v1262 = vsel %vm712, %v1261, %v1216
        %v1263 = vsel %vm714, %v1262, %v1220
        %v1264 = vsel %vm716, %v1263, %v1224
        %v1265 = vsel %vm718, %v1264, %v1228
        %v1266 = vsel %vm720, %v1265, %v1232
        %v1267 = vsel %vm722, %v1266, %v1236
        %v1268 = vsel %vm724, %v1267, %v1240
        %v1269 = vsel %vm726, %v1268, %v1244
        %v1270 = vsel %vm728, %v1269, %v1248
        %v1271 = vsel %vm730, %v1270, %v1252
        %v1272 = vsel %vm732, %v1271, %v1256
        %1274 = vrot.lane.b32.xlu0 %v1272, 32
        %v1275 = vpop.permute.xlu0 %1274
        %vm1277 = vcmask 261120
        %v1278 = vsel %vm1277, %v733, %v1275
        %vm1279 = vcmask 523264
        %1280 = vst.msk [vmem:[%s159] sm:$0xff] %vm1279, %v1278
        %p1281 = scmp.lt.s32.totalorder %s19, 1
        %s1282 = scalar_select %p1281, %s19, 1
        %p1283 = scmp.lt.s32.totalorder %s20, 1
        %s1284 = scalar_select %p1283, %s20, 1
        %s1285 = smul.addr %s1282, 2
        %s1286 = sadd.s32 %s1284, %s1285
        %s1287 = smul.addr %s1286, 8
        %s1288 = scalar_lea.vmem %s1, %s1287
        // Predicated region
        $region29: #{_iwt_impl.1} parent=23 // pred_check
          %p1289 = pneg %p75
        $region30: #{_iwt_impl.1} parent=23 // pred_check_branch
          %1291 = sbr.rel (%p1289) target = $region32
        $region31: #{_iwt_impl.1} parent=23 // pred_region
          _
        $region32: #{_iwt_impl.1} parent=23 // pred_fallthru
          _
      $region24: #{_iwt_impl.1} parent=5 // pred_fallthru
        _
      %p1292 = scmp.le.s32.totalorder 2, %s10
      // Predicated region
      $region33: #{_iwt_impl.1} parent=5 // pred_check
        %p1293 = pneg %p1292
      $region34: #{_iwt_impl.1} parent=5 // pred_check_branch
        %1295 = sbr.rel (%p1293) target = $region36
      $region35: #{_iwt_impl.1} parent=5 // pred_region
        %s1296 = ssub.s32 %s10, 2
        // Predicated region
        $region37: #{_iwt_impl.1} parent=35 // pred_check
          %p1297 = pneg %p81
        $region38: #{_iwt_impl.1} parent=35 // pred_check_branch
          %1299 = sbr.rel (%p1297) target = $region40
        $region39: #{_iwt_impl.1} parent=35 // pred_region
          %p1300 = scmp.lt.s32.totalorder %s21, 1
          %s1301 = scalar_select %p1300, %s21, 1
          %p1302 = scmp.lt.s32.totalorder %s22, 1
          %s1303 = scalar_select %p1302, %s22, 1
          %s1304 = smul.addr %s1301, 2
          %s1305 = sadd.s32 %s1303, %s1304
          %s1306 = smul.addr %s1305, 8
          %s1307 = scalar_lea.vmem %s1, %s1306
        $region40: #{_iwt_impl.1} parent=35 // pred_fallthru
          _
      $region36: #{_iwt_impl.1} parent=5 // pred_fallthru
        _
    $region6: #{_iwt_impl.1} parent=1 // loop_footer
      %s14 = sadd.s32 1, %s10
    $region7: #{_iwt_impl.1} parent=1 // loop_footer_branch
      %9 = sbr.rel target = $region3
    $region8: #{_iwt_impl.1} parent=1 // loop_exit
      _
    %1308 = vsyncpa [#allocation3], 1
    %s1309 = scalar_lea.sflag [#allocation3], 1
    %1310 = vsyncpa %s1309, 1

</llo_original>
